<compile_context>
chip_gen: v7x
topology: tpu7x:2x2x1
jax: 0.10.0
libtpu: 0.0.40
codegen_flags: <defaults>
</compile_context>

<pallas_src>
import functools

import jax
import jax.numpy as jnp
from jax.experimental import pallas as pl
from jax.experimental.pallas import tpu as pltpu


def _sep_conv_bn_relu_kernel(x_ref, wd_ref, wpt_ref, shift_ref, o_ref,
                             *, H, W, KH, KW, pad, Cin, Cout):
    """Fused depthwise conv + BN-scaled pointwise conv + shift + ReLU6.

    x_ref:     (1, Cin, L)   flat input, L = (H + 2*pad)*W + 2*pad.
                             H is zero-padded with `pad` rows top/bottom and the
                             flat axis gets `pad` extra zeros at both ends, so every
                             (kh, kw) tap is a *static lane shift* of the flat array.
    wd_ref:    (Cin, KH*KW)  depthwise weights.
    wpt_ref:   (Cout, Cin)   pointwise 1x1 weights with BN scale pre-folded.
    shift_ref: (Cout, 1)     beta - running_mean * scale.
    o_ref:     (1, Cout, H*W) lane-dense (minor dim multiple of 128), channels-major.
    """
    HW = H * W
    x = x_ref[0].astype(jnp.float32)               # (Cin, L)
    wd = wd_ref[...].astype(jnp.float32)           # (Cin, KH*KW)

    # Column index of each flattened output pixel.  Needed because W is not padded:
    # taps with a horizontal offset wrap across row boundaries and must be masked.
    col = jax.lax.broadcasted_iota(jnp.int32, (1, HW), 1) % W   # (1, HW)

    # Depthwise conv: accumulate the KH*KW taps, grouped by kw so each horizontal
    # offset group is masked exactly once.
    acc = jnp.zeros((Cin, HW), dtype=jnp.float32)
    for kw in range(KW):
        dx = kw - pad
        part = jnp.zeros((Cin, HW), dtype=jnp.float32)
        for kh in range(KH):
            off = kh * W + kw                                   # static lane offset
            tap = x[:, off:off + HW]                            # (Cin, HW)
            w_tap = wd[:, kh * KW + kw:kh * KW + kw + 1]        # (Cin, 1) lane bcast
            part = part + tap * w_tap
        if dx < 0:                                              # true input col < 0
            part = jnp.where(col >= -dx, part, 0.0)
        elif dx > 0:                                            # true input col >= W
            part = jnp.where(col < W - dx, part, 0.0)
        acc = acc + part

    # Pointwise 1x1 conv (BN scale already folded into wpt) on the MXU, transposed
    # orientation so the result (Cout, H*W) is lane-dense and channels-major.
    z = jnp.dot(wpt_ref[...].astype(jnp.float32), acc,
                preferred_element_type=jnp.float32)             # (Cout, HW)
    z = z + shift_ref[...]                                      # (Cout, 1) lane bcast
    z = jnp.clip(z, 0.0, 6.0)                                   # ReLU6
    o_ref[0] = z.astype(o_ref.dtype)


def separable_conv2d_bn_relu(x_nchw, w_dw, w_pw, gamma, beta, run_mean, run_var,
                             *, kernel_size=3, padding=1, eps=1e-5):
    """x_nchw: (N, Cin, H, W). w_dw: (Cin, 1, KH, KW). w_pw: (Cout, Cin, 1, 1).

    Implements stride=1, dilation=1, bias=False, eval-mode BatchNorm (as instantiated).
    """
    N, Cin, H, W = x_nchw.shape
    Cout = w_pw.shape[0]
    KH = KW = kernel_size
    HW = H * W
    L = (H + 2 * padding) * W + 2 * padding

    # Channels-major, spatial-flattened input with zero rows for the H padding and
    # `padding` extra zeros at both ends of the flat axis (single embed op; the
    # reshape of x itself is a free bitcast).  W is intentionally NOT padded.
    # TODO(synk): this zero-embed could be moved into the kernel via a zero-initialized
    # VMEM scratch + offset store to remove the last wrapper data-movement op.
    start = padding + padding * W
    x_flat = x_nchw.reshape(N, Cin, HW)
    x_pad = jnp.zeros((N, Cin, L), dtype=x_nchw.dtype).at[:, :, start:start + HW].set(x_flat)

    # Depthwise weights: (Cin, KH*KW).
    wd = w_dw[:, 0, :, :].reshape(Cin, KH * KW)

    # Fold eval-mode BN scale into the pointwise weights; keep only the shift.
    scale = (gamma / jnp.sqrt(run_var + eps)).astype(jnp.float32)          # (Cout,)
    wpt = w_pw[:, :, 0, 0].astype(jnp.float32) * scale[:, None]            # (Cout, Cin)
    shift = (beta - run_mean * scale).reshape(Cout, 1).astype(jnp.float32)  # (Cout, 1)

    kernel = functools.partial(_sep_conv_bn_relu_kernel, H=H, W=W, KH=KH, KW=KW,
                               pad=padding, Cin=Cin, Cout=Cout)

    out_flat = pl.pallas_call(
        kernel,
        out_shape=jax.ShapeDtypeStruct((N, Cout, HW), x_nchw.dtype),
        grid_spec=pltpu.PrefetchScalarGridSpec(
            num_scalar_prefetch=0,
            grid=(N,),                                   # 2-way parallel -> both v7x TCs
            in_specs=[
                pl.BlockSpec((1, Cin, L), lambda n: (n, 0, 0)),
                pl.BlockSpec((Cin, KH * KW), lambda n: (0, 0)),
                pl.BlockSpec((Cout, Cin), lambda n: (0, 0)),
                pl.BlockSpec((Cout, 1), lambda n: (0, 0)),
            ],
            out_specs=pl.BlockSpec((1, Cout, HW), lambda n: (n, 0, 0)),
        ),
        compiler_params=pltpu.CompilerParams(dimension_semantics=("parallel",)),
    )(x_pad, wd, wpt, shift)

    # Already channels-major: just a free bitcast back to (N, Cout, H, W).
    return out_flat.reshape(N, Cout, H, W)


def _reference(x_nchw, w_dw, w_pw, gamma, beta, run_mean, run_var,
               *, kernel_size=3, padding=1, eps=1e-5):
    """Plain-JAX reference (same math, lax convolutions)."""
    Cin = x_nchw.shape[1]
    dw = jax.lax.conv_general_dilated(
        x_nchw, w_dw, window_strides=(1, 1), padding=[(padding, padding)] * 2,
        dimension_numbers=("NCHW", "OIHW", "NCHW"), feature_group_count=Cin)
    pw = jax.lax.conv_general_dilated(
        dw, w_pw, window_strides=(1, 1), padding=[(0, 0)] * 2,
        dimension_numbers=("NCHW", "OIHW", "NCHW"))
    scale = gamma / jnp.sqrt(run_var + eps)
    shift = beta - run_mean * scale
    bn = pw * scale[None, :, None, None] + shift[None, :, None, None]
    return jnp.clip(bn, 0.0, 6.0)


if __name__ == "__main__":
    N, Cin, H, W = 2, 4, 16, 16
    Cout, K, PAD = 8, 3, 1

    key = jax.random.PRNGKey(0)
    k_x, k_dw, k_pw, k_g, k_b, k_m, k_v = jax.random.split(key, 7)

    x = jax.random.normal(k_x, (N, Cin, H, W), dtype=jnp.float32)
    w_dw = jax.random.normal(k_dw, (Cin, 1, K, K), dtype=jnp.float32) * 0.2
    w_pw = jax.random.normal(k_pw, (Cout, Cin, 1, 1), dtype=jnp.float32) * 0.2
    gamma = 1.0 + 0.1 * jax.random.normal(k_g, (Cout,), dtype=jnp.float32)
    beta = 0.1 * jax.random.normal(k_b, (Cout,), dtype=jnp.float32)
    run_mean = 0.1 * jax.random.normal(k_m, (Cout,), dtype=jnp.float32)
    run_var = jnp.abs(jax.random.normal(k_v, (Cout,), dtype=jnp.float32)) + 0.5

    out = separable_conv2d_bn_relu(x, w_dw, w_pw, gamma, beta, run_mean, run_var,
                                   kernel_size=K, padding=PAD)
    out = jax.block_until_ready(out)

    ref = _reference(x, w_dw, w_pw, gamma, beta, run_mean, run_var,
                     kernel_size=K, padding=PAD)
    assert out.shape == (N, Cout, H, W)
    assert jnp.allclose(out, ref, atol=2e-3, rtol=2e-3), "mismatch vs reference"

    print("KERNEL_OK")
</pallas_src>

<mosaic_0001>
module attributes {stable_mosaic.version = 11 : i64} {
  func.func @_sep_conv_bn_relu_kernel(%arg0: i32, %arg1: memref<1x4x290xf32, #tpu.memory_space<vmem>>, %arg2: memref<4x9xf32, #tpu.memory_space<vmem>>, %arg3: memref<8x4xf32, #tpu.memory_space<vmem>>, %arg4: memref<8x1xf32, #tpu.memory_space<vmem>>, %arg5: memref<1x8x256xf32, #tpu.memory_space<vmem>>) attributes {dimension_semantics = [#tpu.dimension_semantics<parallel>], iteration_bounds = array<i64: 2>, scalar_prefetch = 0 : i64, scratch_operands = 0 : i64, tpu.core_type = #tpu.core_type<tc>, window_params = [{transform_indices = @transform_0, window_bounds = array<i64: 1, 4, 290>}, {pipeline_mode = #tpu.pipeline_mode<synchronous>, transform_indices = @transform_1, window_bounds = array<i64: 4, 9>}, {pipeline_mode = #tpu.pipeline_mode<synchronous>, transform_indices = @transform_2, window_bounds = array<i64: 8, 4>}, {pipeline_mode = #tpu.pipeline_mode<synchronous>, transform_indices = @transform_3, window_bounds = array<i64: 8, 1>}, {transform_indices = @transform_4, window_bounds = array<i64: 1, 8, 256>}]} {
    %c0 = arith.constant 0 : index
    %c0_0 = arith.constant 0 : index
    %c0_1 = arith.constant 0 : index
    %0 = vector.load %arg1[%c0, %c0_0, %c0_1] : memref<1x4x290xf32, #tpu.memory_space<vmem>>, vector<1x4x290xf32>
    %1 = vector.shape_cast %0 : vector<1x4x290xf32> to vector<4x290xf32>
    %c0_2 = arith.constant 0 : index
    %c0_3 = arith.constant 0 : index
    %2 = vector.load %arg2[%c0_2, %c0_3] : memref<4x9xf32, #tpu.memory_space<vmem>>, vector<4x9xf32>
    %3 = tpu.iota {dimensions = array<i32: 1>} : vector<1x256xi32>
    %c16_i32 = arith.constant 16 : i32
    %c0_i32 = arith.constant 0 : i32
    %4 = arith.cmpi eq, %c16_i32, %c0_i32 : i32
    %c1_i32 = arith.constant 1 : i32
    %5 = arith.select %4, %c1_i32, %c16_i32 : i32
    %6 = vector.broadcast %5 : i32 to vector<1x256xi32>
    %7 = arith.remsi %3, %6 : vector<1x256xi32>
    %c0_i32_4 = arith.constant 0 : i32
    %8 = vector.broadcast %c0_i32_4 : i32 to vector<1x256xi32>
    %9 = arith.cmpi ne, %7, %8 : vector<1x256xi32>
    %c0_i32_5 = arith.constant 0 : i32
    %10 = vector.broadcast %c0_i32_5 : i32 to vector<1x256xi32>
    %11 = arith.cmpi slt, %7, %10 : vector<1x256xi32>
    %c0_i32_6 = arith.constant 0 : i32
    %12 = arith.cmpi slt, %5, %c0_i32_6 : i32
    %13 = vector.broadcast %12 : i1 to vector<1x256xi1>
    %14 = vector.broadcast %13 : vector<1x256xi1> to vector<1x256xi1>
    %15 = arith.xori %11, %14 : vector<1x256xi1>
    %16 = arith.andi %15, %9 : vector<1x256xi1>
    %17 = vector.broadcast %5 : i32 to vector<1x256xi32>
    %18 = arith.addi %7, %17 : vector<1x256xi32>
    %19 = arith.select %16, %18, %7 : vector<1x256xi1>, vector<1x256xi32>
    %cst = arith.constant 0.000000e+00 : f32
    %20 = vector.broadcast %cst : f32 to vector<4x256xf32>
    %cst_7 = arith.constant 0.000000e+00 : f32
    %21 = vector.broadcast %cst_7 : f32 to vector<4x256xf32>
    %22 = vector.extract_strided_slice %1 {offsets = [0, 0], sizes = [4, 256], strides = [1, 1]} : vector<4x290xf32> to vector<4x256xf32>
    %23 = vector.extract_strided_slice %2 {offsets = [0, 0], sizes = [4, 1], strides = [1, 1]} : vector<4x9xf32> to vector<4x1xf32>
    %24 = vector.broadcast %23 : vector<4x1xf32> to vector<4x256xf32>
    %25 = arith.mulf %22, %24 : vector<4x256xf32>
    %26 = arith.addf %21, %25 : vector<4x256xf32>
    %27 = vector.extract_strided_slice %1 {offsets = [0, 16], sizes = [4, 256], strides = [1, 1]} : vector<4x290xf32> to vector<4x256xf32>
    %28 = vector.extract_strided_slice %2 {offsets = [0, 3], sizes = [4, 1], strides = [1, 1]} : vector<4x9xf32> to vector<4x1xf32>
    %29 = vector.broadcast %28 : vector<4x1xf32> to vector<4x256xf32>
    %30 = arith.mulf %27, %29 : vector<4x256xf32>
    %31 = arith.addf %26, %30 : vector<4x256xf32>
    %32 = vector.extract_strided_slice %1 {offsets = [0, 32], sizes = [4, 256], strides = [1, 1]} : vector<4x290xf32> to vector<4x256xf32>
    %33 = vector.extract_strided_slice %2 {offsets = [0, 6], sizes = [4, 1], strides = [1, 1]} : vector<4x9xf32> to vector<4x1xf32>
    %34 = vector.broadcast %33 : vector<4x1xf32> to vector<4x256xf32>
    %35 = arith.mulf %32, %34 : vector<4x256xf32>
    %36 = arith.addf %31, %35 : vector<4x256xf32>
    %c1_i32_8 = arith.constant 1 : i32
    %37 = vector.broadcast %c1_i32_8 : i32 to vector<1x256xi32>
    %38 = arith.cmpi sge, %19, %37 : vector<1x256xi32>
    %cst_9 = arith.constant 0.000000e+00 : f32
    %39 = vector.shape_cast %38 : vector<1x256xi1> to vector<1x256xi1>
    %40 = vector.broadcast %39 : vector<1x256xi1> to vector<4x256xi1>
    %41 = vector.broadcast %cst_9 : f32 to vector<4x256xf32>
    %42 = arith.select %40, %36, %41 : vector<4x256xi1>, vector<4x256xf32>
    %43 = arith.addf %20, %42 : vector<4x256xf32>
    %cst_10 = arith.constant 0.000000e+00 : f32
    %44 = vector.broadcast %cst_10 : f32 to vector<4x256xf32>
    %45 = vector.extract_strided_slice %1 {offsets = [0, 1], sizes = [4, 256], strides = [1, 1]} : vector<4x290xf32> to vector<4x256xf32>
    %46 = vector.extract_strided_slice %2 {offsets = [0, 1], sizes = [4, 1], strides = [1, 1]} : vector<4x9xf32> to vector<4x1xf32>
    %47 = vector.broadcast %46 : vector<4x1xf32> to vector<4x256xf32>
    %48 = arith.mulf %45, %47 : vector<4x256xf32>
    %49 = arith.addf %44, %48 : vector<4x256xf32>
    %50 = vector.extract_strided_slice %1 {offsets = [0, 17], sizes = [4, 256], strides = [1, 1]} : vector<4x290xf32> to vector<4x256xf32>
    %51 = vector.extract_strided_slice %2 {offsets = [0, 4], sizes = [4, 1], strides = [1, 1]} : vector<4x9xf32> to vector<4x1xf32>
    %52 = vector.broadcast %51 : vector<4x1xf32> to vector<4x256xf32>
    %53 = arith.mulf %50, %52 : vector<4x256xf32>
    %54 = arith.addf %49, %53 : vector<4x256xf32>
    %55 = vector.extract_strided_slice %1 {offsets = [0, 33], sizes = [4, 256], strides = [1, 1]} : vector<4x290xf32> to vector<4x256xf32>
    %56 = vector.extract_strided_slice %2 {offsets = [0, 7], sizes = [4, 1], strides = [1, 1]} : vector<4x9xf32> to vector<4x1xf32>
    %57 = vector.broadcast %56 : vector<4x1xf32> to vector<4x256xf32>
    %58 = arith.mulf %55, %57 : vector<4x256xf32>
    %59 = arith.addf %54, %58 : vector<4x256xf32>
    %60 = arith.addf %43, %59 : vector<4x256xf32>
    %cst_11 = arith.constant 0.000000e+00 : f32
    %61 = vector.broadcast %cst_11 : f32 to vector<4x256xf32>
    %62 = vector.extract_strided_slice %1 {offsets = [0, 2], sizes = [4, 256], strides = [1, 1]} : vector<4x290xf32> to vector<4x256xf32>
    %63 = vector.extract_strided_slice %2 {offsets = [0, 2], sizes = [4, 1], strides = [1, 1]} : vector<4x9xf32> to vector<4x1xf32>
    %64 = vector.broadcast %63 : vector<4x1xf32> to vector<4x256xf32>
    %65 = arith.mulf %62, %64 : vector<4x256xf32>
    %66 = arith.addf %61, %65 : vector<4x256xf32>
    %67 = vector.extract_strided_slice %1 {offsets = [0, 18], sizes = [4, 256], strides = [1, 1]} : vector<4x290xf32> to vector<4x256xf32>
    %68 = vector.extract_strided_slice %2 {offsets = [0, 5], sizes = [4, 1], strides = [1, 1]} : vector<4x9xf32> to vector<4x1xf32>
    %69 = vector.broadcast %68 : vector<4x1xf32> to vector<4x256xf32>
    %70 = arith.mulf %67, %69 : vector<4x256xf32>
    %71 = arith.addf %66, %70 : vector<4x256xf32>
    %72 = vector.extract_strided_slice %1 {offsets = [0, 34], sizes = [4, 256], strides = [1, 1]} : vector<4x290xf32> to vector<4x256xf32>
    %73 = vector.extract_strided_slice %2 {offsets = [0, 8], sizes = [4, 1], strides = [1, 1]} : vector<4x9xf32> to vector<4x1xf32>
    %74 = vector.broadcast %73 : vector<4x1xf32> to vector<4x256xf32>
    %75 = arith.mulf %72, %74 : vector<4x256xf32>
    %76 = arith.addf %71, %75 : vector<4x256xf32>
    %c15_i32 = arith.constant 15 : i32
    %77 = vector.broadcast %c15_i32 : i32 to vector<1x256xi32>
    %78 = arith.cmpi slt, %19, %77 : vector<1x256xi32>
    %cst_12 = arith.constant 0.000000e+00 : f32
    %79 = vector.shape_cast %78 : vector<1x256xi1> to vector<1x256xi1>
    %80 = vector.broadcast %79 : vector<1x256xi1> to vector<4x256xi1>
    %81 = vector.broadcast %cst_12 : f32 to vector<4x256xf32>
    %82 = arith.select %80, %76, %81 : vector<4x256xi1>, vector<4x256xf32>
    %83 = arith.addf %60, %82 : vector<4x256xf32>
    %c0_13 = arith.constant 0 : index
    %c0_14 = arith.constant 0 : index
    %84 = vector.load %arg3[%c0_13, %c0_14] : memref<8x4xf32, #tpu.memory_space<vmem>>, vector<8x4xf32>
    %cst_15 = arith.constant dense<0.000000e+00> : vector<8x256xf32>
    %85 = tpu.matmul %84, %83, %cst_15 {dimension_numbers = #tpu.dot_dimension_numbers<[1], [0], [0], [1], [0, 0, 1, 1], [], []>} : vector<8x4xf32>, vector<4x256xf32>, vector<8x256xf32> -> vector<8x256xf32>
    %c0_16 = arith.constant 0 : index
    %c0_17 = arith.constant 0 : index
    %86 = vector.load %arg4[%c0_16, %c0_17] : memref<8x1xf32, #tpu.memory_space<vmem>>, vector<8x1xf32>
    %87 = vector.broadcast %86 : vector<8x1xf32> to vector<8x256xf32>
    %88 = arith.addf %85, %87 : vector<8x256xf32>
    %cst_18 = arith.constant 0.000000e+00 : f32
    %cst_19 = arith.constant 6.000000e+00 : f32
    %89 = vector.broadcast %cst_18 : f32 to vector<8x256xf32>
    %90 = arith.maximumf %89, %88 : vector<8x256xf32>
    %91 = vector.broadcast %cst_19 : f32 to vector<8x256xf32>
    %92 = arith.minimumf %91, %90 : vector<8x256xf32>
    %c0_20 = arith.constant 0 : index
    %c0_21 = arith.constant 0 : index
    %c0_22 = arith.constant 0 : index
    %93 = vector.load %arg5[%c0_20, %c0_21, %c0_22] : memref<1x8x256xf32, #tpu.memory_space<vmem>>, vector<1x8x256xf32>
    %94 = vector.shape_cast %93 : vector<1x8x256xf32> to vector<8x256xf32>
    %95 = vector.shape_cast %92 : vector<8x256xf32> to vector<1x8x256xf32>
    tpu.vector_store %arg5[%c0_20, %c0_21, %c0_22], %95 {strides = array<i32>} : memref<1x8x256xf32, #tpu.memory_space<vmem>>, vector<1x8x256xf32>,
    return
  }
  func.func @transform_0(%arg0: i32) -> (i32, i32, i32) {
    %c0_i32 = arith.constant 0 : i32
    %c0_i32_0 = arith.constant 0 : i32
    %c0_i32_1 = arith.constant 0 : i32
    return %arg0, %c0_i32, %c0_i32_0 : i32, i32, i32
  }
  func.func @transform_1(%arg0: i32) -> (i32, i32) {
    %c0_i32 = arith.constant 0 : i32
    %c0_i32_0 = arith.constant 0 : i32
    %c0_i32_1 = arith.constant 0 : i32
    return %c0_i32, %c0_i32_0 : i32, i32
  }
  func.func @transform_2(%arg0: i32) -> (i32, i32) {
    %c0_i32 = arith.constant 0 : i32
    %c0_i32_0 = arith.constant 0 : i32
    %c0_i32_1 = arith.constant 0 : i32
    return %c0_i32, %c0_i32_0 : i32, i32
  }
  func.func @transform_3(%arg0: i32) -> (i32, i32) {
    %c0_i32 = arith.constant 0 : i32
    %c0_i32_0 = arith.constant 0 : i32
    %c0_i32_1 = arith.constant 0 : i32
    return %c0_i32, %c0_i32_0 : i32, i32
  }
  func.func @transform_4(%arg0: i32) -> (i32, i32, i32) {
    %c0_i32 = arith.constant 0 : i32
    %c0_i32_0 = arith.constant 0 : i32
    %c0_i32_1 = arith.constant 0 : i32
    return %arg0, %c0_i32, %c0_i32_0 : i32, i32, i32
  }
}

</mosaic_0001>

<llo_original>
// kernel: tpu_custom_call.1
$region0: #{tpu_custom_call.1}
  #allocation0 [shape = 'u32[]', space=smem, size = 0x4, offset = 0x4, fixed_abs, tag = 'smem constant byte address 0x4 - core index']
  #allocation1 [shape = 'u32[144,128]{1,0:T(1,128)}', space=vmem, size = 0x12000, scoped, tag = 'internal scratch']
  %s0 = inlined_call_operand.hbm [shape: f32[2,4,290], index: 0, kind: input, shape index: {}]
  %s1 = inlined_call_operand.vmem [shape: f32[4,9], index: 1, kind: input, shape index: {}]
  %s2 = inlined_call_operand.vmem [shape: f32[8,4], index: 2, kind: input, shape index: {}]
  %s3 = inlined_call_operand.vmem [shape: f32[8,1], index: 3, kind: input, shape index: {}]
  %s4 = inlined_call_operand.hbm [shape: f32[2,8,256], index: 4, kind: output, shape index: {}]
  %s5 = sld [smem:[#allocation0]]
  $region53: #{tpu_custom_call.1} parent=0
    _
  %s7 = ssub.s32 1, %s5
  %s8 = scalar_select 0, %s7, %s5
  $region1: #{tpu_custom_call.1} parent=0
    #allocation2 [shape = 'u8[12288]{0}', space=vmem, size = 0x3000, scoped, tag = 'input window, operand 0']
    #allocation3 [shape = 's32[2]{0}', space=sflag, size = 0x8, scoped, tag = 'scoped memory for tpu_custom_call.1']
    #allocation4 [shape = 's32[2]{0}', space=sflag, size = 0x8, scoped, tag = 'scoped memory for tpu_custom_call.1']
    #allocation5 [shape = 'u8[16384]{0}', space=vmem, size = 0x4000, scoped, tag = 'output window, operand 0']
    %9 = vsyncpa [#allocation3], 0
    %s10 = scalar_lea.sflag [#allocation3], 1
    %11 = vsyncpa %s10, 0
    %12 = vsyncpa [#allocation4], 0
    %s13 = scalar_lea.sflag [#allocation4], 1
    %14 = vsyncpa %s13, 0
    loop: start=0, step=1, limit=4
    $region2: #{tpu_custom_call.1} parent=1 // loop_pre_header
      _
    $region3: #{tpu_custom_call.1} parent=1 // loop_header
      %s16 = sphi 0, %s20
      %p17 = scmp.ge.s32.totalorder %s16, 4
      %s26 = sphi 0, %s28
      %s29 = sphi 0, %s26
      %s30 = sphi 0, %s29
      %s46 = sphi 0, %s30
      %s50 = sphi 0, %s50
      %s52 = sphi 0, %s50
      %s53 = sphi 0, %s52
      %s67 = sphi 0, %s53
      %s71 = sphi 0, %s71
      %s73 = sphi 0, %s71
      %s74 = sphi 0, %s73
      %s88 = sphi 0, %s74
      %s92 = sphi 0, %s92
      %s94 = sphi 0, %s92
      %s95 = sphi 0, %s94
      %s109 = sphi 0, %s95
      %s115 = sphi 0, %s117
      %s118 = sphi 0, %s115
      %s119 = sphi 0, %s118
      %s135 = sphi 0, %s119
    $region4: #{tpu_custom_call.1} parent=1 // loop_header_branch
      %19 = sbr.rel (%p17) target = $region8
    $region5: #{tpu_custom_call.1} parent=1 // loop_body
      %s21 = ssub.s32 %s16, 1
      %s22 = ssub.s32 %s16, 2
      %s23 = sadd.s32 %s16, 1
      %s24 = ssub.s32 %s16, %s23
      %p25 = scmp.eq.s32.totalorder %s24, 0
      %s27 = sadd.s32 %s26, 1
      %s28 = scalar_select %p25, %s26, %s27
      %p31 = pneg %p25
      %p32 = scmp.eq.s32.totalorder %s16, 1
      %p33 = por %p31, %p32
      %p34 = scmp.ne.s32.totalorder %s26, %s29
      %p35 = scmp.eq.s32.totalorder %s16, 0
      %p36 = por %p34, %p35
      %p37 = scmp.ne.s32.totalorder %s26, %s29
      %p38 = scmp.eq.s32.totalorder %s21, 1
      %p39 = por %p37, %p38
      %p40 = scmp.ne.s32.totalorder %s29, %s30
      %p41 = scmp.eq.s32.totalorder %s21, 0
      %p42 = por %p40, %p41
      %p43 = scmp.ne.s32.totalorder %s29, %s30
      %p44 = scmp.eq.s32.totalorder %s22, 1
      %p45 = por %p43, %p44
      %p47 = scmp.ne.s32.totalorder %s30, %s46
      %p48 = scmp.eq.s32.totalorder %s22, 0
      %p49 = por %p47, %p48
      %s51 = sadd.s32 %s50, 1
      %p54 = scmp.eq.s32.totalorder %s16, 1
      %p55 = scmp.ne.s32.totalorder %s50, %s52
      %p56 = scmp.eq.s32.totalorder %s16, 0
      %p57 = por %p55, %p56
      %p58 = scmp.ne.s32.totalorder %s50, %s52
      %p59 = scmp.eq.s32.totalorder %s21, 1
      %p60 = por %p58, %p59
      %p61 = scmp.ne.s32.totalorder %s52, %s53
      %p62 = scmp.eq.s32.totalorder %s21, 0
      %p63 = por %p61, %p62
      %p64 = scmp.ne.s32.totalorder %s52, %s53
      %p65 = scmp.eq.s32.totalorder %s22, 1
      %p66 = por %p64, %p65
      %p68 = scmp.ne.s32.totalorder %s53, %s67
      %p69 = scmp.eq.s32.totalorder %s22, 0
      %p70 = por %p68, %p69
      %s72 = sadd.s32 %s71, 1
      %p75 = scmp.eq.s32.totalorder %s16, 1
      %p76 = scmp.ne.s32.totalorder %s71, %s73
      %p77 = scmp.eq.s32.totalorder %s16, 0
      %p78 = por %p76, %p77
      %p79 = scmp.ne.s32.totalorder %s71, %s73
      %p80 = scmp.eq.s32.totalorder %s21, 1
      %p81 = por %p79, %p80
      %p82 = scmp.ne.s32.totalorder %s73, %s74
      %p83 = scmp.eq.s32.totalorder %s21, 0
      %p84 = por %p82, %p83
      %p85 = scmp.ne.s32.totalorder %s73, %s74
      %p86 = scmp.eq.s32.totalorder %s22, 1
      %p87 = por %p85, %p86
      %p89 = scmp.ne.s32.totalorder %s74, %s88
      %p90 = scmp.eq.s32.totalorder %s22, 0
      %p91 = por %p89, %p90
      %s93 = sadd.s32 %s92, 1
      %p96 = scmp.eq.s32.totalorder %s16, 1
      %p97 = scmp.ne.s32.totalorder %s92, %s94
      %p98 = scmp.eq.s32.totalorder %s16, 0
      %p99 = por %p97, %p98
      %p100 = scmp.ne.s32.totalorder %s92, %s94
      %p101 = scmp.eq.s32.totalorder %s21, 1
      %p102 = por %p100, %p101
      %p103 = scmp.ne.s32.totalorder %s94, %s95
      %p104 = scmp.eq.s32.totalorder %s21, 0
      %p105 = por %p103, %p104
      %p106 = scmp.ne.s32.totalorder %s94, %s95
      %p107 = scmp.eq.s32.totalorder %s22, 1
      %p108 = por %p106, %p107
      %p110 = scmp.ne.s32.totalorder %s95, %s109
      %p111 = scmp.eq.s32.totalorder %s22, 0
      %p112 = por %p110, %p111
      %s113 = ssub.s32 %s16, %s23
      %p114 = scmp.eq.s32.totalorder %s113, 0
      %s116 = sadd.s32 %s115, 1
      %s117 = scalar_select %p114, %s115, %s116
      %p120 = pneg %p114
      %p121 = scmp.eq.s32.totalorder %s16, 1
      %p122 = por %p120, %p121
      %p123 = scmp.ne.s32.totalorder %s115, %s118
      %p124 = scmp.eq.s32.totalorder %s16, 0
      %p125 = por %p123, %p124
      %p126 = scmp.ne.s32.totalorder %s115, %s118
      %p127 = scmp.eq.s32.totalorder %s21, 1
      %p128 = por %p126, %p127
      %p129 = scmp.ne.s32.totalorder %s118, %s119
      %p130 = scmp.eq.s32.totalorder %s21, 0
      %p131 = por %p129, %p130
      %p132 = scmp.ne.s32.totalorder %s118, %s119
      %p133 = scmp.eq.s32.totalorder %s22, 1
      %p134 = por %p132, %p133
      %p136 = scmp.ne.s32.totalorder %s119, %s135
      %p137 = scmp.eq.s32.totalorder %s22, 0
      %p138 = por %p136, %p137
      %p139 = scmp.le.s32.totalorder 1, %s16
      %p140 = scmp.lt.s32.totalorder %s16, 3
      %p141 = pnand %p139, %p140
      %p142 = pneg %p141
      // Predicated region
      $region9: #{tpu_custom_call.1} parent=5 // pred_check
        _
      $region10: #{tpu_custom_call.1} parent=5 // pred_check_branch
        %144 = sbr.rel (%p141) target = $region12
      $region11: #{tpu_custom_call.1} parent=5 // pred_region
        %s145 = ssub.s32 %s16, 1
        // Predicated region
        $region13: #{tpu_custom_call.1} parent=11 // pred_check
          %p146 = pneg %p63
        $region14: #{tpu_custom_call.1} parent=11 // pred_check_branch
          %148 = sbr.rel (%p146) target = $region16
        $region15: #{tpu_custom_call.1} parent=11 // pred_region
          _
        $region16: #{tpu_custom_call.1} parent=11 // pred_fallthru
          _
        // Predicated region
        $region17: #{tpu_custom_call.1} parent=11 // pred_check
          %p149 = pneg %p84
        $region18: #{tpu_custom_call.1} parent=11 // pred_check_branch
          %151 = sbr.rel (%p149) target = $region20
        $region19: #{tpu_custom_call.1} parent=11 // pred_region
          _
        $region20: #{tpu_custom_call.1} parent=11 // pred_fallthru
          _
        // Predicated region
        $region21: #{tpu_custom_call.1} parent=11 // pred_check
          %p152 = pneg %p105
        $region22: #{tpu_custom_call.1} parent=11 // pred_check_branch
          %154 = sbr.rel (%p152) target = $region24
        $region23: #{tpu_custom_call.1} parent=11 // pred_region
          _
        $region24: #{tpu_custom_call.1} parent=11 // pred_fallthru
          _
      $region12: #{tpu_custom_call.1} parent=5 // pred_fallthru
        _
      %p155 = scmp.lt.s32.totalorder %s16, 2
      // Predicated region
      $region25: #{tpu_custom_call.1} parent=5 // pred_check
        %p156 = pneg %p155
      $region26: #{tpu_custom_call.1} parent=5 // pred_check_branch
        %158 = sbr.rel (%p156) target = $region28
      $region27: #{tpu_custom_call.1} parent=5 // pred_region
        // Predicated region
        $region29: #{tpu_custom_call.1} parent=27 // pred_check
          %p159 = pneg %p36
        $region30: #{tpu_custom_call.1} parent=27 // pred_check_branch
          %161 = sbr.rel (%p159) target = $region32
        $region31: #{tpu_custom_call.1} parent=27 // pred_region
          %s162 = sand.u32 %s26, 1
          %s163 = scalar_lea.sflag [#allocation3], %s162
          %s164 = sand.u32 %s26, 1
          %s165 = smul.addr %s164, 12
          %s166 = scalar_lea.vmem [#allocation2], %s165
          %s168 = ssub.s32 192, 192
          %169 = vsyncadd %s163, %s168
          %s170 = smul.addr %s16, 3
          %s171 = smul.addr %s170, 64
          %s172 = scalar_lea.hbm %s0, %s171
          %s174 = sshll.u32 %s166, 4
          %s175 = int_to_ptr.vmem [resolvable:$true] %s174
          %177 = dma.hbm_to_vmem [thread:$0]  %s172, 192, %s175, %s163
        $region32: #{tpu_custom_call.1} parent=27 // pred_fallthru
          _
      $region28: #{tpu_custom_call.1} parent=5 // pred_fallthru
        _
      %p178 = scmp.le.s32.totalorder 1, %s16
      %p179 = scmp.lt.s32.totalorder %s16, 3
      %p180 = pnand %p178, %p179
      %p181 = pneg %p180
      // Predicated region
      $region33: #{tpu_custom_call.1} parent=5 // pred_check
        _
      $region34: #{tpu_custom_call.1} parent=5 // pred_check_branch
        %183 = sbr.rel (%p180) target = $region36
      $region35: #{tpu_custom_call.1} parent=5 // pred_region
        %s184 = ssub.s32 %s16, 1
        %s185 = sand.u32 %s29, 1
        %s186 = scalar_lea.sflag [#allocation3], %s185
        %s187 = sand.u32 %s29, 1
        %s188 = smul.addr %s187, 12
        %s189 = scalar_lea.vmem [#allocation2], %s188
        // Predicated region
        $region37: #{tpu_custom_call.1} parent=35 // pred_check
          %p190 = pneg %p42
        $region38: #{tpu_custom_call.1} parent=35 // pred_check_branch
          %192 = sbr.rel (%p190) target = $region40
        $region39: #{tpu_custom_call.1} parent=35 // pred_region
          %193 = dma.done %s186, 192
        $region40: #{tpu_custom_call.1} parent=35 // pred_fallthru
          _
        %s194 = sand.u32 %s29, 1
        %s195 = scalar_lea.sflag [#allocation3], %s194
        %s196 = sand.u32 %s29, 1
        %s197 = smul.addr %s196, 12
        %s198 = scalar_lea.vmem [#allocation2], %s197
        %p199 = pneg %p42
        %p200 = pneg %p39
        %p201 = pneg %p63
        %p202 = pneg %p60
        %p203 = pneg %p84
        %p204 = pneg %p81
        %p205 = pneg %p105
        %p206 = pneg %p102
        %p207 = pneg %p131
        %p208 = pneg %p128
        %s209 = sand.u32 %s118, 1
        %s210 = scalar_lea.sflag [#allocation4], %s209
        %s211 = sand.u32 %s118, 1
        %s212 = smul.addr %s211, 16
        %s213 = scalar_lea.vmem [#allocation5], %s212
        %v214 = vld [vmem:[%s189] sm:$0xff]
        %v215 = vld [vmem:[%s189 + $0x8] sm:$0xf]
        %v216 = vld [vmem:[%s1] sm:$0xf]
        %v217 = vlaneseq
        %v218 = vand.u32 %v217, 127
        %v219 = vadd.s32 %v218, 128
        %vm220 = vcmp.lt.s32.totalorder %v218, 0
        %v221 = vsub.s32 0, %v218
        %v222 = vsel %vm220, %v221, %v218
        %v223 = vshrl.u32 %v222, 4
        %v224 = vand.u32 %v222, 15
        %v225 = vsub.s32 0, %v224
        %v226 = vsel %vm220, %v225, %v224
        %vm227 = vcmp.lt.s32.totalorder %v219, 0
        %v228 = vsub.s32 0, %v219
        %v229 = vsel %vm227, %v228, %v219
        %v230 = vshrl.u32 %v229, 4
        %v231 = vand.u32 %v229, 15
        %v232 = vsub.s32 0, %v231
        %v233 = vsel %vm227, %v232, %v231
        %vm234 = vcmp.ne.s32.totalorder %v226, 0
        %vm235 = vcmp.ne.s32.totalorder %v233, 0
        %vm236 = vcmp.lt.s32.totalorder %v226, 0
        %vm237 = vcmp.lt.s32.totalorder %v233, 0
        %vm238 = vmand %vm236, %vm234
        %vm239 = vmand %vm237, %vm235
        %v240 = vadd.s32 %v226, 16
        %v241 = vadd.s32 %v233, 16
        %v242 = vsel %vm238, %v240, %v226
        %v243 = vsel %vm239, %v241, %v233
        %245 = vset.pattern.permute.xlu0 0
        %246 = vperm.xlu0 %245, %v216
        %v247 = vpop.permute.xlu0 %246
        %v249 = vunpack.c.l.s4 839922192
        %v250 = vunpack.c.0.s8 %v249
        %v251 = vlaneseq
        %v252 = vshrl.u32 %v251, 7
        %v253 = vsub.s32 %v250, %v252
        %v254 = vrot.slane %v247, %v253
        %v256 = vmul.f32 %v214, %v254
        %v257 = vadd.f32 %v256, 0.0
        %258 = vset.pattern.permute.xlu0 3
        %259 = vperm.xlu0 %258, %v216
        %v260 = vpop.permute.xlu0 %259
        %v262 = vunpack.c.l.s4 839922192
        %v263 = vunpack.c.0.s8 %v262
        %v264 = vlaneseq
        %v265 = vshrl.u32 %v264, 7
        %v266 = vsub.s32 %v263, %v265
        %v267 = vrot.slane %v260, %v266
        %v269 = vmul.f32 %v214, %v267
        %v270 = vmul.f32 %v215, %v267
        %273 = vrot.lane.b32.xlu0 %v269, 112
        %v274 = vpop.permute.xlu0 %273
        %275 = vrot.lane.b32.xlu0 %v270, 112
        %v276 = vpop.permute.xlu0 %275
        %v277 = vrot.slane %v274, 4
        %v278 = vrot.slane %v276, 4
        %vm279 = vcmask 1043456
        %v280 = vsel %vm279, %v277, %v278
        %vm281 = vcmask 916480
        %v282 = vsel %vm281, %v274, %v280
        %v284 = vadd.f32 %v257, %v282
        %285 = vset.pattern.permute.xlu0 6
        %286 = vperm.xlu0 %285, %v216
        %v287 = vpop.permute.xlu0 %286
        %v289 = vunpack.c.l.s4 839922192
        %v290 = vunpack.c.0.s8 %v289
        %v291 = vlaneseq
        %v292 = vshrl.u32 %v291, 7
        %v293 = vsub.s32 %v290, %v292
        %v294 = vrot.slane %v287, %v293
        %v296 = vmul.f32 %v214, %v294
        %v297 = vmul.f32 %v215, %v294
        %300 = vrot.lane.b32.xlu0 %v296, 96
        %v301 = vpop.permute.xlu0 %300
        %302 = vrot.lane.b32.xlu0 %v297, 96
        %v303 = vpop.permute.xlu0 %302
        %v304 = vrot.slane %v301, 4
        %v305 = vrot.slane %v303, 4
        %v306 = vsel %vm279, %v304, %v305
        %vm307 = vcmask 785408
        %v308 = vsel %vm307, %v301, %v306
        %v310 = vadd.f32 %v284, %v308
        %vm311 = vcmp.ge.s32.totalorder %v242, 1
        %vm312 = vcmp.ge.s32.totalorder %v243, 1
        %v313 = vsel %vm311, 1, 0
        %v314 = vsel %vm312, 1, 0
        %vm315 = vcmp.eq.s32.totalorder %v313, 1
        %vm316 = vcmp.eq.s32.totalorder %v314, 1
        %v318 = vcombine.high %v310, %v310
        %v320 = vsel %vm315, %v310, 0.0
        %v321 = vsel %vm316, %v318, 0.0
        %v322 = vadd.f32 %v320, 0.0
        %v323 = vadd.f32 %v321, 0.0
        %324 = vset.pattern.permute.xlu0 1
        %325 = vperm.xlu0 %324, %v216
        %v326 = vpop.permute.xlu0 %325
        %v328 = vunpack.c.l.s4 839922192
        %v329 = vunpack.c.0.s8 %v328
        %v330 = vlaneseq
        %v331 = vshrl.u32 %v330, 7
        %v332 = vsub.s32 %v329, %v331
        %v333 = vrot.slane %v326, %v332
        %v335 = vmul.f32 %v214, %v333
        %v336 = vmul.f32 %v215, %v333
        %v337 = vadd.f32 %v335, 0.0
        %v338 = vadd.f32 %v336, 0.0
        %339 = vset.pattern.permute.xlu0 4
        %340 = vperm.xlu0 %339, %v216
        %v341 = vpop.permute.xlu0 %340
        %v343 = vunpack.c.l.s4 839922192
        %v344 = vunpack.c.0.s8 %v343
        %v345 = vlaneseq
        %v346 = vshrl.u32 %v345, 7
        %v347 = vsub.s32 %v344, %v346
        %v348 = vrot.slane %v341, %v347
        %v350 = vmul.f32 %v214, %v348
        %v351 = vmul.f32 %v215, %v348
        %354 = vrot.lane.b32.xlu0 %v350, 112
        %v355 = vpop.permute.xlu0 %354
        %356 = vrot.lane.b32.xlu0 %v351, 112
        %v357 = vpop.permute.xlu0 %356
        %v358 = vrot.slane %v355, 4
        %v359 = vrot.slane %v357, 4
        %v360 = vsel %vm279, %v358, %v359
        %v361 = vsel %vm281, %v355, %v360
        %v364 = vadd.f32 %v337, %v361
        %v365 = vadd.f32 %v338, %v357
        %366 = vset.pattern.permute.xlu0 7
        %367 = vperm.xlu0 %366, %v216
        %v368 = vpop.permute.xlu0 %367
        %v370 = vunpack.c.l.s4 839922192
        %v371 = vunpack.c.0.s8 %v370
        %v372 = vlaneseq
        %v373 = vshrl.u32 %v372, 7
        %v374 = vsub.s32 %v371, %v373
        %v375 = vrot.slane %v368, %v374
        %v377 = vmul.f32 %v214, %v375
        %v378 = vmul.f32 %v215, %v375
        %381 = vrot.lane.b32.xlu0 %v377, 96
        %v382 = vpop.permute.xlu0 %381
        %383 = vrot.lane.b32.xlu0 %v378, 96
        %v384 = vpop.permute.xlu0 %383
        %v385 = vrot.slane %v382, 4
        %v386 = vrot.slane %v384, 4
        %v387 = vsel %vm279, %v385, %v386
        %v388 = vsel %vm307, %v382, %v387
        %v391 = vadd.f32 %v364, %v388
        %v392 = vadd.f32 %v365, %v384
        %v395 = vcombine.high %v391, %v391
        %396 = vrot.lane.b32.xlu0 %v391, 127
        %v397 = vpop.permute.xlu0 %396
        %398 = vrot.lane.b32.xlu0 %v395, 127
        %v399 = vpop.permute.xlu0 %398
        %400 = vrot.lane.b32.xlu0 %v392, 127
        %v401 = vpop.permute.xlu0 %400
        %vm402 = vcmask 1039360
        %v403 = vsel %vm402, %v397, %v399
        %v404 = vsel %vm402, %v399, %v401
        %v407 = vadd.f32 %v322, %v403
        %v408 = vadd.f32 %v323, %v404
        %409 = vset.pattern.permute.xlu0 2
        %410 = vperm.xlu0 %409, %v216
        %v411 = vpop.permute.xlu0 %410
        %v413 = vunpack.c.l.s4 839922192
        %v414 = vunpack.c.0.s8 %v413
        %v415 = vlaneseq
        %v416 = vshrl.u32 %v415, 7
        %v417 = vsub.s32 %v414, %v416
        %v418 = vrot.slane %v411, %v417
        %v420 = vmul.f32 %v214, %v418
        %v421 = vmul.f32 %v215, %v418
        %v422 = vadd.f32 %v420, 0.0
        %v423 = vadd.f32 %v421, 0.0
        %424 = vset.pattern.permute.xlu0 5
        %425 = vperm.xlu0 %424, %v216
        %v426 = vpop.permute.xlu0 %425
        %v428 = vunpack.c.l.s4 839922192
        %v429 = vunpack.c.0.s8 %v428
        %v430 = vlaneseq
        %v431 = vshrl.u32 %v430, 7
        %v432 = vsub.s32 %v429, %v431
        %v433 = vrot.slane %v426, %v432
        %v435 = vmul.f32 %v214, %v433
        %v436 = vmul.f32 %v215, %v433
        %439 = vrot.lane.b32.xlu0 %v435, 112
        %v440 = vpop.permute.xlu0 %439
        %441 = vrot.lane.b32.xlu0 %v436, 112
        %v442 = vpop.permute.xlu0 %441
        %v443 = vrot.slane %v440, 4
        %v444 = vrot.slane %v442, 4
        %v445 = vsel %vm279, %v443, %v444
        %v446 = vsel %vm281, %v440, %v445
        %v449 = vadd.f32 %v422, %v446
        %v450 = vadd.f32 %v423, %v442
        %451 = vset.pattern.permute.xlu0 8
        %452 = vperm.xlu0 %451, %v216
        %v453 = vpop.permute.xlu0 %452
        %v455 = vunpack.c.l.s4 839922192
        %v456 = vunpack.c.0.s8 %v455
        %v457 = vlaneseq
        %v458 = vshrl.u32 %v457, 7
        %v459 = vsub.s32 %v456, %v458
        %v460 = vrot.slane %v453, %v459
        %v462 = vmul.f32 %v214, %v460
        %v463 = vmul.f32 %v215, %v460
        %466 = vrot.lane.b32.xlu0 %v462, 96
        %v467 = vpop.permute.xlu0 %466
        %468 = vrot.lane.b32.xlu0 %v463, 96
        %v469 = vpop.permute.xlu0 %468
        %v470 = vrot.slane %v467, 4
        %v471 = vrot.slane %v469, 4
        %v472 = vsel %vm279, %v470, %v471
        %v473 = vsel %vm307, %v467, %v472
        %v476 = vadd.f32 %v449, %v473
        %v477 = vadd.f32 %v450, %v469
        %vm478 = vcmp.lt.s32.totalorder %v242, 15
        %vm479 = vcmp.lt.s32.totalorder %v243, 15
        %v480 = vsel %vm478, 1, 0
        %v481 = vsel %vm479, 1, 0
        %vm482 = vcmp.eq.s32.totalorder %v480, 1
        %vm483 = vcmp.eq.s32.totalorder %v481, 1
        %v486 = vcombine.high %v476, %v476
        %487 = vrot.lane.b32.xlu0 %v476, 126
        %v488 = vpop.permute.xlu0 %487
        %489 = vrot.lane.b32.xlu0 %v486, 126
        %v490 = vpop.permute.xlu0 %489
        %491 = vrot.lane.b32.xlu0 %v477, 126
        %v492 = vpop.permute.xlu0 %491
        %vm493 = vcmask 1031168
        %v494 = vsel %vm493, %v488, %v490
        %v495 = vsel %vm493, %v490, %v492
        %v498 = vsel %vm482, %v494, 0.0
        %v499 = vsel %vm483, %v495, 0.0
        %v500 = vadd.f32 %v407, %v498
        %v501 = vadd.f32 %v408, %v499
        %v502 = vld [vmem:[%s2] sm:$0xff]
        %v503 = vld [vmem:[%s3] sm:$0xff]
        %505 = vset.pattern.permute.xlu0 0
        %506 = vperm.xlu0 %505, %v503
        %v507 = vpop.permute.xlu0 %506
        %vm509 = vcmask 31744
        %v511 = vsel %vm509, %v502, 0
        %v514 = vsel %vm279, %v500, 0
        %v517 = vsel %vm279, %v501, 0
        %519 = vmatprep.subr.mxu0 %v517
        %520 = vmatpush1.msra.mxu0 %v514
        %521 = vmatprep.subr.mxu0 0.0
        %522 = vmatpush1.msra.mxu0 0.0
        %523 = vmatprep.subr.mxu0 0.0
        %524 = vmatpush1.msra.mxu0 0.0
        %525 = vmatprep.subr.mxu0 0.0
        %526 = vmatpush1.msra.mxu0 0.0
        %527 = vmatprep.subr.mxu0 0.0
        %528 = vmatpush1.msra.mxu0 0.0
        %529 = vmatprep.subr.mxu0 0.0
        %530 = vmatpush1.msra.mxu0 0.0
        %531 = vmatprep.subr.mxu0 0.0
        %532 = vmatpush1.msra.mxu0 0.0
        %533 = vmatprep.subr.mxu0 0.0
        %534 = vmatpush1.msra.mxu0 0.0
        %535 = vmatprep.subr.mxu0 0.0
        %536 = vmatpush1.msra.mxu0 0.0
        %537 = vmatprep.subr.mxu0 0.0
        %538 = vmatpush1.msra.mxu0 0.0
        %539 = vmatprep.subr.mxu0 0.0
        %540 = vmatpush1.msra.mxu0 0.0
        %541 = vmatprep.subr.mxu0 0.0
        %542 = vmatpush1.msra.mxu0 0.0
        %543 = vmatprep.subr.mxu0 0.0
        %544 = vmatpush1.msra.mxu0 0.0
        %545 = vmatprep.subr.mxu0 0.0
        %546 = vmatpush1.msra.mxu0 0.0
        %547 = vmatprep.subr.mxu0 0.0
        %548 = vmatpush1.msra.mxu0 0.0
        %549 = vmatprep.subr.mxu0 0.0
        %550 = vmatpush1.msra.mxu0 0.0
        %551 = vmatprep.subr.mxu0 0.0
        %552 = vmatpush1.msra.mxu0 0.0
        %553 = vmatprep.subr.mxu0 0.0
        %554 = vmatpush1.msra.mxu0 0.0
        %555 = vmatprep.subr.mxu0 0.0
        %556 = vmatpush1.msra.mxu0 0.0
        %557 = vmatprep.subr.mxu0 0.0
        %558 = vmatpush1.msra.mxu0 0.0
        %559 = vmatprep.subr.mxu0 0.0
        %560 = vmatpush1.msra.mxu0 0.0
        %561 = vmatprep.subr.mxu0 0.0
        %562 = vmatpush1.msra.mxu0 0.0
        %563 = vmatprep.subr.mxu0 0.0
        %564 = vmatpush1.msra.mxu0 0.0
        %565 = vmatprep.subr.mxu0 0.0
        %566 = vmatpush1.msra.mxu0 0.0
        %567 = vmatprep.subr.mxu0 0.0
        %568 = vmatpush1.msra.mxu0 0.0
        %569 = vmatprep.subr.mxu0 0.0
        %570 = vmatpush1.msra.mxu0 0.0
        %571 = vmatprep.subr.mxu0 0.0
        %572 = vmatpush1.msra.mxu0 0.0
        %573 = vmatprep.subr.mxu0 0.0
        %574 = vmatpush1.msra.mxu0 0.0
        %575 = vmatprep.subr.mxu0 0.0
        %576 = vmatpush1.msra.mxu0 0.0
        %577 = vmatprep.subr.mxu0 0.0
        %578 = vmatpush1.msra.mxu0 0.0
        %579 = vmatprep.subr.mxu0 0.0
        %580 = vmatpush1.msra.mxu0 0.0
        %581 = vmatprep.subr.mxu0 0.0
        %582 = vmatpush1.msra.mxu0 0.0
        %583 = vmatprep.mubr.f32.mxu0 0.0
        %584 = vmatmul.mubr.f32.gmra.mrb[0].mxu0 %v511
        %v585 = vpop.f32.mrb[0].mxu0
        %v586 = vadd.f32 %v507, %v585
        %v587 = vpop.f32.mrb[0].mxu0
        %v588 = vadd.f32 %v507, %v587
        %589 = vdwg.mxu0
        %v590 = vmax.f32 %v586, 0.0
        %v591 = vmax.f32 %v588, 0.0
        %v592 = vmin.f32 %v590, 6.0
        %v593 = vmin.f32 %v591, 6.0
        %594 = vst [vmem:[%s213] sm:$0xff] %v592
        %595 = vst [vmem:[%s213 + $0x8] sm:$0xff] %v593
        %s596 = sand.u32 %s118, 1
        %s597 = scalar_lea.sflag [#allocation4], %s596
        %s598 = sand.u32 %s118, 1
        %s599 = smul.addr %s598, 16
        %s600 = scalar_lea.vmem [#allocation5], %s599
        // Predicated region
        $region41: #{tpu_custom_call.1} parent=35 // pred_check
          %p601 = pneg %p128
        $region42: #{tpu_custom_call.1} parent=35 // pred_check_branch
          %603 = sbr.rel (%p601) target = $region44
        $region43: #{tpu_custom_call.1} parent=35 // pred_region
          %s605 = ssub.s32 256, 256
          %606 = vsyncadd %s597, %s605
          %s607 = smul.addr %s21, 2
          %s608 = smul.addr %s607, 128
          %s609 = scalar_lea.hbm %s4, %s608
          %s611 = sshll.u32 %s600, 4
          %s612 = int_to_ptr.vmem [resolvable:$true] %s611
          %614 = dma.vmem_to_hbm [thread:$0]  %s612, 256, %s609, %s597
        $region44: #{tpu_custom_call.1} parent=35 // pred_fallthru
          _
      $region36: #{tpu_custom_call.1} parent=5 // pred_fallthru
        _
      %p615 = scmp.le.s32.totalorder 2, %s16
      // Predicated region
      $region45: #{tpu_custom_call.1} parent=5 // pred_check
        %p616 = pneg %p615
      $region46: #{tpu_custom_call.1} parent=5 // pred_check_branch
        %618 = sbr.rel (%p616) target = $region48
      $region47: #{tpu_custom_call.1} parent=5 // pred_region
        %s619 = ssub.s32 %s16, 2
        // Predicated region
        $region49: #{tpu_custom_call.1} parent=47 // pred_check
          %p620 = pneg %p134
        $region50: #{tpu_custom_call.1} parent=47 // pred_check_branch
          %622 = sbr.rel (%p620) target = $region52
        $region51: #{tpu_custom_call.1} parent=47 // pred_region
          %s623 = sand.u32 %s119, 1
          %s624 = scalar_lea.sflag [#allocation4], %s623
          %s625 = sand.u32 %s119, 1
          %s626 = smul.addr %s625, 16
          %s627 = scalar_lea.vmem [#allocation5], %s626
          %628 = dma.done %s624, 256
        $region52: #{tpu_custom_call.1} parent=47 // pred_fallthru
          _
      $region48: #{tpu_custom_call.1} parent=5 // pred_fallthru
        _
    $region6: #{tpu_custom_call.1} parent=1 // loop_footer
      %s20 = sadd.s32 1, %s16
    $region7: #{tpu_custom_call.1} parent=1 // loop_footer_branch
      %15 = sbr.rel target = $region3
    $region8: #{tpu_custom_call.1} parent=1 // loop_exit
      _
    %629 = vsyncpa [#allocation3], 1
    %s630 = scalar_lea.sflag [#allocation3], 1
    %631 = vsyncpa %s630, 1
    %632 = vsyncpa [#allocation4], 1
    %s633 = scalar_lea.sflag [#allocation4], 1
    %634 = vsyncpa %s633, 1

</llo_original>
